<compile_context>
chip_gen: v7x
topology: tpu7x:2x2x1
jax: 0.10.0
libtpu: 0.0.40
codegen_flags: <defaults>
</compile_context>

<pallas_src>
import numpy as np
import jax
import jax.numpy as jnp
from jax.experimental import pallas as pl
from jax.experimental.pallas import tpu as pltpu

_LOG_2PI = float(np.log(2.0 * np.pi))
_NEG_BIG = -1e30      # "minus infinity" used to mask padded logit rows


def _round_up(x, m):
    return ((x + m - 1) // m) * m


def _make_kernel(n_gauss, sigma_row_start, cat_groups, min_sigma, min_prob):
    """Build the loss kernel for a static (pre-permuted, 8-aligned) layout.

    n_gauss          : Gaussian features; mu rows are dp[0:n_gauss], raw sigma
                       rows are dp[sigma_row_start:sigma_row_start+n_gauss],
                       their gt/mask rows are rows [0, n_gauss).
    cat_groups       : tuple of (f_start, p_start, size, s_pad, k): a group of
                       k categorical features that all have `size` classes.
                       Feature j of the group owns gt/mask row f_start + j and
                       dp rows [p_start + j*s_pad, p_start + j*s_pad + size);
                       the remaining s_pad - size rows are alignment padding.
    All block starts are multiples of 8 and s_pad % 8 == 0, so every slice /
    reshape below is sublane-tile aligned (no relayout copies).
    """
    n_gauss = int(n_gauss)
    sigma_row_start = int(sigma_row_start)
    cat_groups = tuple((int(a), int(b), int(c), int(d), int(e))
                       for a, b, c, d, e in cat_groups)
    min_sigma = float(min_sigma)
    min_prob = float(min_prob)

    def kernel(gt_ref, dp_ref, mk_ref, out_ref):
        gt = gt_ref[...].astype(jnp.float32)   # (F_pad, TB) -- may contain NaN
        dp = dp_ref[...].astype(jnp.float32)   # (D_pad, TB), rows permuted
        mk = mk_ref[...].astype(jnp.float32)   # (F_pad, TB)
        tb = gt.shape[-1]

        nan_mask = jnp.isnan(gt)
        gt_safe = jnp.where(nan_mask, 0.0, gt)
        mk = jnp.where(nan_mask, 0.0, mk)      # missing values contribute 0

        total = jnp.zeros((1, tb), jnp.float32)

        # ---- all Gaussian features in one vectorized block -----------------
        if n_gauss > 0:
            mu = dp[0:n_gauss, :]                                    # (nG, TB)
            sig_raw = dp[sigma_row_start:sigma_row_start + n_gauss, :]
            sigma = jnp.maximum(jax.nn.softplus(sig_raw), min_sigma)
            # exact divide: approx reciprocal error would leak into z^2
            z = (gt_safe[0:n_gauss, :] - mu) / sigma
            lp = -0.5 * (z * z) - jnp.log(sigma) - 0.5 * _LOG_2PI
            total = total + jnp.sum(lp * mk[0:n_gauss, :], axis=0,
                                    keepdims=True)

        # ---- categorical features: one batched block per distinct size -----
        for f_start, p_start, size, s_pad, k in cat_groups:
            logits = dp[p_start:p_start + k * s_pad, :].reshape(k, s_pad, tb)
            cls = jax.lax.broadcasted_iota(jnp.int32, (k, s_pad, tb), 1)
            valid = cls < size                       # padded rows are invalid
            logits = jnp.where(valid, logits, _NEG_BIG)
            m = jnp.max(logits, axis=1, keepdims=True)             # (k,1,TB)
            e = jnp.exp(logits - m)                                # pad rows->0
            denom0 = jnp.sum(e, axis=1, keepdims=True)             # (k,1,TB)
            probs = jnp.where(valid, jnp.maximum(e / denom0, min_prob), 0.0)
            denom = jnp.sum(probs, axis=1)                         # (k, TB)
            idx = gt_safe[f_start:f_start + k, :].astype(jnp.int32)
            idx = jnp.clip(idx, 0, size - 1)        # guard log(0) * mask(0)
            sel = cls == idx[:, None, :]
            p_sel = jnp.sum(jnp.where(sel, probs, 0.0), axis=1)    # (k, TB)
            # two logs per feature instead of `size` logs per element
            col_lp = jnp.log(p_sel) - jnp.log(denom)               # (k, TB)
            total = total + jnp.sum(col_lp * mk[f_start:f_start + k, :],
                                    axis=0, keepdims=True)

        out_ref[...] = total                                       # (1, TB)

    return kernel


class GaussianCategoricalLoss:
    """JAX/Pallas port of VAEAC GaussianCategoricalLoss (forward only)."""

    def __init__(self, one_hot_max_sizes, min_sigma=1e-4, min_prob=1e-4):
        sizes = tuple(int(s) for s in one_hot_max_sizes)
        self.one_hot_max_sizes = sizes
        self.min_sigma = float(min_sigma)
        self.min_prob = float(min_prob)

        # Offsets of each feature's params in the original distr_params layout.
        offs, cur = [], 0
        for s in sizes:
            offs.append(cur)
            cur += 2 if s <= 1 else s
        self.n_params = cur

        gauss = [i for i, s in enumerate(sizes) if s <= 1]
        n_gauss = len(gauss)

        # ---- permuted + 8-aligned row layouts -------------------------------
        # params: [ mu block | pad | sigma block | pad | cat group_0 | ... ]
        # feats : [ gaussian feats | pad | group_0 feats | pad | group_1 ... ]
        # Every block start is a multiple of 8, so every kernel slice is
        # sublane-tile aligned.  Pad rows duplicate row 0 and are never used.
        param_perm = [offs[i] for i in gauss]                      # mu rows
        param_perm += [0] * (_round_up(len(param_perm), 8) - len(param_perm))
        sigma_row_start = len(param_perm)
        param_perm += [offs[i] + 1 for i in gauss]                 # sigma rows
        param_perm += [0] * (_round_up(len(param_perm), 8) - len(param_perm))

        feat_perm = list(gauss)
        feat_perm += [0] * (_round_up(len(feat_perm), 8) - len(feat_perm))

        # Bucket categorical features by exact class count so each bucket is
        # one batched softmax block with a scalar class-count (no constant
        # tables inside the kernel).
        buckets = {}
        for i, s in enumerate(sizes):
            if s > 1:
                buckets.setdefault(s, []).append(i)

        cat_groups = []
        for s in sorted(buckets):
            feats = buckets[s]
            s_pad = _round_up(s, 8)
            f_start = len(feat_perm)
            p_start = len(param_perm)
            for i in feats:
                feat_perm.append(i)
                param_perm.extend(range(offs[i], offs[i] + s))
                param_perm += [offs[i]] * (s_pad - s)              # pad rows
            feat_perm += [0] * (_round_up(len(feat_perm), 8) - len(feat_perm))
            cat_groups.append((f_start, p_start, s, s_pad, len(feats)))

        self.n_gauss = n_gauss
        self.sigma_row_start = sigma_row_start
        self.cat_groups = tuple(cat_groups)
        self.F_pad = len(feat_perm)
        self.D_pad = len(param_perm)
        self.feat_perm = np.asarray(feat_perm, np.int32)
        self.param_perm = np.asarray(param_perm, np.int32)
        self._kernel = _make_kernel(n_gauss, sigma_row_start, self.cat_groups,
                                    self.min_sigma, self.min_prob)

    def __call__(self, groundtruth, distr_params, mask, tile_b=None):
        B, F = groundtruth.shape
        assert F == len(self.one_hot_max_sizes)
        assert distr_params.shape == (B, self.n_params)
        assert mask.shape == (B, F)

        # Batch -> lane axis: one gather + one transpose per operand.
        # TODO(synk): have the upstream projection emit distr_params already
        # as (D_pad, B) with pre-permuted rows (fold the permutation into its
        # weight matrix) so the largest wrapper-side HBM round trip disappears.
        gt_t = jnp.transpose(jnp.take(groundtruth, self.feat_perm, axis=1))
        mk_t = jnp.transpose(jnp.take(mask, self.feat_perm, axis=1))
        dp_t = jnp.transpose(jnp.take(distr_params, self.param_perm, axis=1))

        # ---- batch tiling ----------------------------------------------------
        b128 = _round_up(B, 128)
        if tile_b is None:
            # VMEM-budget-derived tile: double-buffered in/out bytes per lane,
            # targeting ~8 MiB of pipeline buffers (well below the 32 MiB
            # scoped limit on v5e/v6e/v7x, leaving headroom for temporaries).
            bytes_per_lane = (self.F_pad * (gt_t.dtype.itemsize
                                            + mk_t.dtype.itemsize)
                              + self.D_pad * dp_t.dtype.itemsize + 4)
            budget = 8 * 1024 * 1024
            tile_b = (budget // (2 * bytes_per_lane)) // 128 * 128
            tile_b = max(128, min(8192, int(tile_b)))
        TILE_B = max(128, min(_round_up(int(tile_b), 128), b128))
        # Keep >= 2 grid steps when the batch allows it so the "parallel"
        # axis can shard across both TensorCores on megacore parts (v7x).
        if TILE_B >= b128 and b128 >= 256:
            TILE_B = _round_up(b128 // 2, 128)
        Bp = _round_up(B, TILE_B)
        if Bp != B:
            pad = ((0, 0), (0, Bp - B))
            gt_t = jnp.pad(gt_t, pad)    # zeros: mask==0 => contributes 0
            mk_t = jnp.pad(mk_t, pad)
            dp_t = jnp.pad(dp_t, pad)

        F_pad, D_pad = self.F_pad, self.D_pad
        out = pl.pallas_call(
            self._kernel,
            out_shape=jax.ShapeDtypeStruct((1, Bp), jnp.float32),
            grid=(Bp // TILE_B,),
            in_specs=[
                pl.BlockSpec((F_pad, TILE_B), lambda i: (0, i)),
                pl.BlockSpec((D_pad, TILE_B), lambda i: (0, i)),
                pl.BlockSpec((F_pad, TILE_B), lambda i: (0, i)),
            ],
            out_specs=pl.BlockSpec((1, TILE_B), lambda i: (0, i)),
            compiler_params=pltpu.CompilerParams(
                dimension_semantics=("parallel",),
                vmem_limit_bytes=32 * 1024 * 1024,
            ),
        )(gt_t, dp_t, mk_t)
        return out[0, :B]


def _reference(one_hot_max_sizes, min_sigma, min_prob, gt, dp, mk):
    """Pure-numpy reference mirroring the PyTorch module, for verification."""
    gt = np.asarray(gt, np.float64)
    dp = np.asarray(dp, np.float64)
    mk = np.asarray(mk, np.float64)
    cur = 0
    cols = []
    for i, size in enumerate(one_hot_max_sizes):
        g = gt[:, i:i + 1]
        m = mk[:, i:i + 1]
        nanm = np.isnan(g)
        gs = np.where(nanm, 0.0, g)
        m = m * (1.0 - nanm.astype(np.float64))
        if size <= 1:
            mu = dp[:, cur:cur + 1]
            sp_in = dp[:, cur + 1:cur + 2]
            sig = np.log1p(np.exp(-np.abs(sp_in))) + np.maximum(sp_in, 0.0)
            sig = np.maximum(sig, min_sigma)
            cur += 2
            lp = -0.5 * ((gs - mu) / sig) ** 2 - np.log(sig) \
                - 0.5 * np.log(2 * np.pi)
        else:
            logits = dp[:, cur:cur + size]
            cur += size
            e = np.exp(logits - logits.max(-1, keepdims=True))
            p = e / e.sum(-1, keepdims=True)
            p = np.maximum(p, min_prob)
            p = p / p.sum(-1, keepdims=True)
            idx = gs.astype(np.int64)[:, 0]
            lp = np.log(p[np.arange(p.shape[0]), idx])[:, None]
        cols.append(lp * m)
    return np.concatenate(cols, 1).sum(-1)


def _make_inputs(key, one_hot_max_sizes, B):
    F = len(one_hot_max_sizes)
    D = sum(2 if s <= 1 else s for s in one_hot_max_sizes)
    k1, k2, k3, k4, k5 = jax.random.split(key, 5)
    gt = np.zeros((B, F), np.float32)
    real_vals = np.asarray(jax.random.normal(k1, (B, F)), np.float32)
    for i, s in enumerate(one_hot_max_sizes):
        if s <= 1:
            gt[:, i] = real_vals[:, i]
        else:
            gt[:, i] = np.asarray(
                jax.random.randint(jax.random.fold_in(k2, i), (B,), 0, s),
                np.float32)
    # inject a few missing values (NaNs)
    nan_rows = np.asarray(jax.random.randint(k5, (3,), 0, B))
    nan_cols = np.asarray(jax.random.randint(jax.random.fold_in(k5, 1),
                                             (3,), 0, F))
    gt[nan_rows, nan_cols] = np.nan
    distr_params = np.asarray(jax.random.normal(k3, (B, D)), np.float32)
    mask = np.asarray(jax.random.bernoulli(k4, 0.7, (B, F)), np.float32)
    return gt, distr_params, mask


if __name__ == "__main__":
    configs = [
        ([4, 1, 1, 2], 8),          # the module docstring example
        ([2, 1, 2, 1, 3, 2], 200),  # batched same-size categoricals, 2 tiles
    ]
    key = jax.random.PRNGKey(0)
    for cfg_i, (sizes, B) in enumerate(configs):
        gt, dp, mk = _make_inputs(jax.random.fold_in(key, cfg_i), sizes, B)
        loss = GaussianCategoricalLoss(sizes)
        out = loss(jnp.asarray(gt), jnp.asarray(dp), jnp.asarray(mk))
        out = jax.block_until_ready(out)
        ref = _reference(sizes, loss.min_sigma, loss.min_prob, gt, dp, mk)
        assert out.shape == (B,)
        assert np.allclose(np.asarray(out, np.float64), ref,
                           atol=1e-4, rtol=1e-4), f"mismatch on config {cfg_i}"
    print("KERNEL_OK")
</pallas_src>

<mosaic_0001>
module attributes {stable_mosaic.version = 11 : i64} {
  func.func @kernel(%arg0: i32, %arg1: memref<24x128xf32, #tpu.memory_space<vmem>>, %arg2: memref<32x128xf32, #tpu.memory_space<vmem>>, %arg3: memref<24x128xf32, #tpu.memory_space<vmem>>, %arg4: memref<1x128xf32, #tpu.memory_space<vmem>>) attributes {dimension_semantics = [#tpu.dimension_semantics<parallel>], iteration_bounds = array<i64: 1>, scalar_prefetch = 0 : i64, scratch_operands = 0 : i64, tpu.core_type = #tpu.core_type<tc>, window_params = [{transform_indices = @transform_0, window_bounds = array<i64: 24, 128>}, {transform_indices = @transform_1, window_bounds = array<i64: 32, 128>}, {transform_indices = @transform_2, window_bounds = array<i64: 24, 128>}, {transform_indices = @transform_3, window_bounds = array<i64: 1, 128>}]} {
    %c0 = arith.constant 0 : index
    %c0_0 = arith.constant 0 : index
    %0 = vector.load %arg1[%c0, %c0_0] : memref<24x128xf32, #tpu.memory_space<vmem>>, vector<24x128xf32>
    %c0_1 = arith.constant 0 : index
    %c0_2 = arith.constant 0 : index
    %1 = vector.load %arg2[%c0_1, %c0_2] : memref<32x128xf32, #tpu.memory_space<vmem>>, vector<32x128xf32>
    %c0_3 = arith.constant 0 : index
    %c0_4 = arith.constant 0 : index
    %2 = vector.load %arg3[%c0_3, %c0_4] : memref<24x128xf32, #tpu.memory_space<vmem>>, vector<24x128xf32>
    %3 = arith.cmpf one, %0, %0 : vector<24x128xf32>
    %cst = arith.constant 0.000000e+00 : f32
    %4 = vector.broadcast %cst : f32 to vector<24x128xf32>
    %5 = arith.select %3, %4, %0 : vector<24x128xi1>, vector<24x128xf32>
    %cst_5 = arith.constant 0.000000e+00 : f32
    %6 = vector.broadcast %cst_5 : f32 to vector<24x128xf32>
    %7 = arith.select %3, %6, %2 : vector<24x128xi1>, vector<24x128xf32>
    %cst_6 = arith.constant 0.000000e+00 : f32
    %8 = vector.broadcast %cst_6 : f32 to vector<1x128xf32>
    %9 = vector.extract_strided_slice %1 {offsets = [0, 0], sizes = [2, 128], strides = [1, 1]} : vector<32x128xf32> to vector<2x128xf32>
    %10 = vector.extract_strided_slice %1 {offsets = [8, 0], sizes = [2, 128], strides = [1, 1]} : vector<32x128xf32> to vector<2x128xf32>
    %cst_7 = arith.constant 0.000000e+00 : f32
    %11 = vector.broadcast %cst_7 : f32 to vector<2x128xf32>
    %12 = arith.maximumf %10, %11 : vector<2x128xf32>
    %13 = vector.broadcast %cst_7 : f32 to vector<2x128xf32>
    %14 = arith.subf %10, %13 : vector<2x128xf32>
    %15 = arith.cmpf one, %14, %14 : vector<2x128xf32>
    %16 = vector.broadcast %cst_7 : f32 to vector<2x128xf32>
    %17 = arith.addf %10, %16 : vector<2x128xf32>
    %18 = math.absf %14 : vector<2x128xf32>
    %cst_8 = arith.constant 0.000000e+00 : f32
    %19 = vector.broadcast %cst_8 : f32 to vector<2x128xf32>
    %20 = arith.subf %19, %18 : vector<2x128xf32>
    %21 = math.exp %20 : vector<2x128xf32>
    %22 = math.log1p %21 : vector<2x128xf32>
    %23 = arith.addf %12, %22 : vector<2x128xf32>
    %24 = arith.select %15, %17, %23 : vector<2x128xi1>, vector<2x128xf32>
    %cst_9 = arith.constant 9.99999974E-5 : f32
    %25 = vector.broadcast %cst_9 : f32 to vector<2x128xf32>
    %26 = arith.maximumf %24, %25 : vector<2x128xf32>
    %27 = vector.extract_strided_slice %5 {offsets = [0, 0], sizes = [2, 128], strides = [1, 1]} : vector<24x128xf32> to vector<2x128xf32>
    %28 = arith.subf %27, %9 : vector<2x128xf32>
    %29 = arith.divf %28, %26 : vector<2x128xf32>
    %30 = arith.mulf %29, %29 : vector<2x128xf32>
    %cst_10 = arith.constant -5.000000e-01 : f32
    %31 = vector.broadcast %cst_10 : f32 to vector<2x128xf32>
    %32 = arith.mulf %31, %30 : vector<2x128xf32>
    %33 = math.log %26 : vector<2x128xf32>
    %34 = arith.subf %32, %33 : vector<2x128xf32>
    %cst_11 = arith.constant 0.918938517 : f32
    %35 = vector.broadcast %cst_11 : f32 to vector<2x128xf32>
    %36 = arith.subf %34, %35 : vector<2x128xf32>
    %37 = vector.extract_strided_slice %7 {offsets = [0, 0], sizes = [2, 128], strides = [1, 1]} : vector<24x128xf32> to vector<2x128xf32>
    %38 = arith.mulf %36, %37 : vector<2x128xf32>
    %cst_12 = arith.constant dense<0.000000e+00> : vector<128xf32>
    %39 = vector.multi_reduction <add>, %38, %cst_12 [0] : vector<2x128xf32> to vector<128xf32>
    %40 = vector.shape_cast %39 : vector<128xf32> to vector<1x128xf32>
    %41 = arith.addf %8, %40 : vector<1x128xf32>
    %42 = vector.extract_strided_slice %1 {offsets = [16, 0], sizes = [8, 128], strides = [1, 1]} : vector<32x128xf32> to vector<8x128xf32>
    %43 = vector.shape_cast %42 : vector<8x128xf32> to vector<1x8x128xf32>
    %44 = tpu.iota {dimensions = array<i32: 1>} : vector<1x8x128xi32>
    %c2_i32 = arith.constant 2 : i32
    %45 = vector.broadcast %c2_i32 : i32 to vector<1x8x128xi32>
    %46 = arith.cmpi slt, %44, %45 : vector<1x8x128xi32>
    %cst_13 = arith.constant -1.000000e+30 : f32
    %47 = vector.broadcast %cst_13 : f32 to vector<1x8x128xf32>
    %48 = arith.select %46, %43, %47 : vector<1x8x128xi1>, vector<1x8x128xf32>
    %cst_14 = arith.constant dense<0xFF800000> : vector<1x128xf32>
    %49 = vector.multi_reduction <maximumf>, %48, %cst_14 [1] : vector<1x8x128xf32> to vector<1x128xf32>
    %50 = vector.shape_cast %49 : vector<1x128xf32> to vector<1x1x128xf32>
    %51 = vector.broadcast %50 : vector<1x1x128xf32> to vector<1x8x128xf32>
    %52 = arith.subf %48, %51 : vector<1x8x128xf32>
    %53 = math.exp %52 : vector<1x8x128xf32>
    %cst_15 = arith.constant dense<0.000000e+00> : vector<1x128xf32>
    %54 = vector.multi_reduction <add>, %53, %cst_15 [1] : vector<1x8x128xf32> to vector<1x128xf32>
    %55 = vector.shape_cast %54 : vector<1x128xf32> to vector<1x1x128xf32>
    %56 = vector.broadcast %55 : vector<1x1x128xf32> to vector<1x8x128xf32>
    %57 = arith.divf %53, %56 : vector<1x8x128xf32>
    %cst_16 = arith.constant 9.99999974E-5 : f32
    %58 = vector.broadcast %cst_16 : f32 to vector<1x8x128xf32>
    %59 = arith.maximumf %57, %58 : vector<1x8x128xf32>
    %cst_17 = arith.constant 0.000000e+00 : f32
    %60 = vector.broadcast %cst_17 : f32 to vector<1x8x128xf32>
    %61 = arith.select %46, %59, %60 : vector<1x8x128xi1>, vector<1x8x128xf32>
    %cst_18 = arith.constant dense<0.000000e+00> : vector<1x128xf32>
    %62 = vector.multi_reduction <add>, %61, %cst_18 [1] : vector<1x8x128xf32> to vector<1x128xf32>
    %63 = vector.extract_strided_slice %5 {offsets = [8, 0], sizes = [1, 128], strides = [1, 1]} : vector<24x128xf32> to vector<1x128xf32>
    %64 = arith.fptosi %63 : vector<1x128xf32> to vector<1x128xi32>
    %c0_i32 = arith.constant 0 : i32
    %c1_i32 = arith.constant 1 : i32
    %65 = vector.broadcast %c0_i32 : i32 to vector<1x128xi32>
    %66 = arith.maxsi %65, %64 : vector<1x128xi32>
    %67 = vector.broadcast %c1_i32 : i32 to vector<1x128xi32>
    %68 = arith.minsi %67, %66 : vector<1x128xi32>
    %69 = vector.shape_cast %68 : vector<1x128xi32> to vector<1x1x128xi32>
    %70 = vector.broadcast %69 : vector<1x1x128xi32> to vector<1x8x128xi32>
    %71 = arith.cmpi eq, %44, %70 : vector<1x8x128xi32>
    %cst_19 = arith.constant 0.000000e+00 : f32
    %72 = vector.broadcast %cst_19 : f32 to vector<1x8x128xf32>
    %73 = arith.select %71, %61, %72 : vector<1x8x128xi1>, vector<1x8x128xf32>
    %cst_20 = arith.constant dense<0.000000e+00> : vector<1x128xf32>
    %74 = vector.multi_reduction <add>, %73, %cst_20 [1] : vector<1x8x128xf32> to vector<1x128xf32>
    %75 = math.log %74 : vector<1x128xf32>
    %76 = math.log %62 : vector<1x128xf32>
    %77 = arith.subf %75, %76 : vector<1x128xf32>
    %78 = vector.extract_strided_slice %7 {offsets = [8, 0], sizes = [1, 128], strides = [1, 1]} : vector<24x128xf32> to vector<1x128xf32>
    %79 = arith.mulf %77, %78 : vector<1x128xf32>
    %cst_21 = arith.constant dense<0.000000e+00> : vector<128xf32>
    %80 = vector.multi_reduction <add>, %79, %cst_21 [0] : vector<1x128xf32> to vector<128xf32>
    %81 = vector.shape_cast %80 : vector<128xf32> to vector<1x128xf32>
    %82 = arith.addf %41, %81 : vector<1x128xf32>
    %83 = vector.extract_strided_slice %1 {offsets = [24, 0], sizes = [8, 128], strides = [1, 1]} : vector<32x128xf32> to vector<8x128xf32>
    %84 = vector.shape_cast %83 : vector<8x128xf32> to vector<1x8x128xf32>
    %85 = tpu.iota {dimensions = array<i32: 1>} : vector<1x8x128xi32>
    %c4_i32 = arith.constant 4 : i32
    %86 = vector.broadcast %c4_i32 : i32 to vector<1x8x128xi32>
    %87 = arith.cmpi slt, %85, %86 : vector<1x8x128xi32>
    %cst_22 = arith.constant -1.000000e+30 : f32
    %88 = vector.broadcast %cst_22 : f32 to vector<1x8x128xf32>
    %89 = arith.select %87, %84, %88 : vector<1x8x128xi1>, vector<1x8x128xf32>
    %cst_23 = arith.constant dense<0xFF800000> : vector<1x128xf32>
    %90 = vector.multi_reduction <maximumf>, %89, %cst_23 [1] : vector<1x8x128xf32> to vector<1x128xf32>
    %91 = vector.shape_cast %90 : vector<1x128xf32> to vector<1x1x128xf32>
    %92 = vector.broadcast %91 : vector<1x1x128xf32> to vector<1x8x128xf32>
    %93 = arith.subf %89, %92 : vector<1x8x128xf32>
    %94 = math.exp %93 : vector<1x8x128xf32>
    %cst_24 = arith.constant dense<0.000000e+00> : vector<1x128xf32>
    %95 = vector.multi_reduction <add>, %94, %cst_24 [1] : vector<1x8x128xf32> to vector<1x128xf32>
    %96 = vector.shape_cast %95 : vector<1x128xf32> to vector<1x1x128xf32>
    %97 = vector.broadcast %96 : vector<1x1x128xf32> to vector<1x8x128xf32>
    %98 = arith.divf %94, %97 : vector<1x8x128xf32>
    %cst_25 = arith.constant 9.99999974E-5 : f32
    %99 = vector.broadcast %cst_25 : f32 to vector<1x8x128xf32>
    %100 = arith.maximumf %98, %99 : vector<1x8x128xf32>
    %cst_26 = arith.constant 0.000000e+00 : f32
    %101 = vector.broadcast %cst_26 : f32 to vector<1x8x128xf32>
    %102 = arith.select %87, %100, %101 : vector<1x8x128xi1>, vector<1x8x128xf32>
    %cst_27 = arith.constant dense<0.000000e+00> : vector<1x128xf32>
    %103 = vector.multi_reduction <add>, %102, %cst_27 [1] : vector<1x8x128xf32> to vector<1x128xf32>
    %104 = vector.extract_strided_slice %5 {offsets = [16, 0], sizes = [1, 128], strides = [1, 1]} : vector<24x128xf32> to vector<1x128xf32>
    %105 = arith.fptosi %104 : vector<1x128xf32> to vector<1x128xi32>
    %c0_i32_28 = arith.constant 0 : i32
    %c3_i32 = arith.constant 3 : i32
    %106 = vector.broadcast %c0_i32_28 : i32 to vector<1x128xi32>
    %107 = arith.maxsi %106, %105 : vector<1x128xi32>
    %108 = vector.broadcast %c3_i32 : i32 to vector<1x128xi32>
    %109 = arith.minsi %108, %107 : vector<1x128xi32>
    %110 = vector.shape_cast %109 : vector<1x128xi32> to vector<1x1x128xi32>
    %111 = vector.broadcast %110 : vector<1x1x128xi32> to vector<1x8x128xi32>
    %112 = arith.cmpi eq, %85, %111 : vector<1x8x128xi32>
    %cst_29 = arith.constant 0.000000e+00 : f32
    %113 = vector.broadcast %cst_29 : f32 to vector<1x8x128xf32>
    %114 = arith.select %112, %102, %113 : vector<1x8x128xi1>, vector<1x8x128xf32>
    %cst_30 = arith.constant dense<0.000000e+00> : vector<1x128xf32>
    %115 = vector.multi_reduction <add>, %114, %cst_30 [1] : vector<1x8x128xf32> to vector<1x128xf32>
    %116 = math.log %115 : vector<1x128xf32>
    %117 = math.log %103 : vector<1x128xf32>
    %118 = arith.subf %116, %117 : vector<1x128xf32>
    %119 = vector.extract_strided_slice %7 {offsets = [16, 0], sizes = [1, 128], strides = [1, 1]} : vector<24x128xf32> to vector<1x128xf32>
    %120 = arith.mulf %118, %119 : vector<1x128xf32>
    %cst_31 = arith.constant dense<0.000000e+00> : vector<128xf32>
    %121 = vector.multi_reduction <add>, %120, %cst_31 [0] : vector<1x128xf32> to vector<128xf32>
    %122 = vector.shape_cast %121 : vector<128xf32> to vector<1x128xf32>
    %123 = arith.addf %82, %122 : vector<1x128xf32>
    %c0_32 = arith.constant 0 : index
    %c0_33 = arith.constant 0 : index
    %124 = vector.load %arg4[%c0_32, %c0_33] : memref<1x128xf32, #tpu.memory_space<vmem>>, vector<1x128xf32>
    tpu.vector_store %arg4[%c0_32, %c0_33], %123 {strides = array<i32>} : memref<1x128xf32, #tpu.memory_space<vmem>>, vector<1x128xf32>,
    return
  }
  func.func @transform_0(%arg0: i32) -> (i32, i32) {
    %c0_i32 = arith.constant 0 : i32
    %c0_i32_0 = arith.constant 0 : i32
    return %c0_i32, %arg0 : i32, i32
  }
  func.func @transform_1(%arg0: i32) -> (i32, i32) {
    %c0_i32 = arith.constant 0 : i32
    %c0_i32_0 = arith.constant 0 : i32
    return %c0_i32, %arg0 : i32, i32
  }
  func.func @transform_2(%arg0: i32) -> (i32, i32) {
    %c0_i32 = arith.constant 0 : i32
    %c0_i32_0 = arith.constant 0 : i32
    return %c0_i32, %arg0 : i32, i32
  }
  func.func @transform_3(%arg0: i32) -> (i32, i32) {
    %c0_i32 = arith.constant 0 : i32
    %c0_i32_0 = arith.constant 0 : i32
    return %c0_i32, %arg0 : i32, i32
  }
}

</mosaic_0001>

<llo_original>
// kernel: tpu_custom_call.1
$region0: #{tpu_custom_call.1}
  #allocation0 [shape = 'u32[]', space=smem, size = 0x4, offset = 0x4, fixed_abs, tag = 'smem constant byte address 0x4 - core index']
  #allocation1 [shape = 'u32[144,128]{1,0:T(1,128)}', space=vmem, size = 0x12000, scoped, tag = 'internal scratch']
  %s0 = inlined_call_operand.hbm [shape: f32[24,128], index: 0, kind: input, shape index: {}]
  %s1 = inlined_call_operand.hbm [shape: f32[32,128], index: 1, kind: input, shape index: {}]
  %s2 = inlined_call_operand.hbm [shape: f32[24,128], index: 2, kind: input, shape index: {}]
  %s3 = inlined_call_operand.hbm [shape: f32[1,128], index: 3, kind: output, shape index: {}]
  %s4 = sld [smem:[#allocation0]]
  $region34: #{tpu_custom_call.1} parent=0
    _
  %s6 = ssub.s32 1, %s4
  %s7 = scalar_select 0, %s6, %s4
  $region1: #{tpu_custom_call.1} parent=0
    #allocation2 [shape = 'u8[12288]{0}', space=vmem, size = 0x3000, scoped, tag = 'input window, operand 0, single buffered']
    #allocation3 [shape = 's32[1]{0}', space=sflag, size = 0x4, scoped, tag = 'scoped memory for tpu_custom_call.1']
    #allocation4 [shape = 's32[1]{0}', space=sflag, size = 0x4, scoped, tag = 'scoped memory for tpu_custom_call.1']
    #allocation5 [shape = 'u8[16384]{0}', space=vmem, size = 0x4000, scoped, tag = 'input window, operand 1, single buffered']
    #allocation6 [shape = 's32[1]{0}', space=sflag, size = 0x4, scoped, tag = 'scoped memory for tpu_custom_call.1']
    #allocation7 [shape = 'u8[12288]{0}', space=vmem, size = 0x3000, scoped, tag = 'input window, operand 2, single buffered']
    #allocation8 [shape = 'u8[512]{0}', space=vmem, size = 0x400, scoped, tag = 'output window, operand 0, single buffered']
    %8 = vsyncpa [#allocation3], 0
    %9 = vsyncpa [#allocation6], 0
    %10 = vsyncpa [#allocation4], 0
    // Predicated region
    $region2: #{tpu_custom_call.1} parent=1 // pred_check
      _
    $region3: #{tpu_custom_call.1} parent=1 // pred_check_branch
      %12 = sbr.rel (0) target = $region5
    $region4: #{tpu_custom_call.1} parent=1 // pred_region
      %s14 = ssub.s32 384, 384
      %15 = vsyncadd [#allocation3], %s14
      %s16 = sshll.u32 [#allocation2], 4
      %s17 = int_to_ptr.vmem [resolvable:$true] %s16
      %22 = dma.hbm_to_vmem [thread:$0]  %s0, 384, %s17, [#allocation3], 128, 128, 8
    $region5: #{tpu_custom_call.1} parent=1 // pred_fallthru
      _
    // Predicated region
    $region6: #{tpu_custom_call.1} parent=1 // pred_check
      _
    $region7: #{tpu_custom_call.1} parent=1 // pred_check_branch
      %24 = sbr.rel (0) target = $region9
    $region8: #{tpu_custom_call.1} parent=1 // pred_region
      %s26 = ssub.s32 512, 512
      %27 = vsyncadd [#allocation6], %s26
      %s28 = sshll.u32 [#allocation5], 4
      %s29 = int_to_ptr.vmem [resolvable:$true] %s28
      %34 = dma.hbm_to_vmem [thread:$0]  %s1, 512, %s29, [#allocation6], 128, 128, 8
    $region9: #{tpu_custom_call.1} parent=1 // pred_fallthru
      _
    // Predicated region
    $region10: #{tpu_custom_call.1} parent=1 // pred_check
      _
    $region11: #{tpu_custom_call.1} parent=1 // pred_check_branch
      %36 = sbr.rel (0) target = $region13
    $region12: #{tpu_custom_call.1} parent=1 // pred_region
      %s38 = ssub.s32 384, 384
      %39 = vsyncadd [#allocation6], %s38
      %s40 = sshll.u32 [#allocation7], 4
      %s41 = int_to_ptr.vmem [resolvable:$true] %s40
      %46 = dma.hbm_to_vmem [thread:$0]  %s2, 384, %s41, [#allocation6], 128, 128, 8
    $region13: #{tpu_custom_call.1} parent=1 // pred_fallthru
      _
    // Predicated region
    $region14: #{tpu_custom_call.1} parent=1 // pred_check
      _
    $region15: #{tpu_custom_call.1} parent=1 // pred_check_branch
      %48 = sbr.rel (0) target = $region17
    $region16: #{tpu_custom_call.1} parent=1 // pred_region
      %49 = dma.done [#allocation3], 384
    $region17: #{tpu_custom_call.1} parent=1 // pred_fallthru
      _
    // Predicated region
    $region18: #{tpu_custom_call.1} parent=1 // pred_check
      _
    $region19: #{tpu_custom_call.1} parent=1 // pred_check_branch
      %51 = sbr.rel (0) target = $region21
    $region20: #{tpu_custom_call.1} parent=1 // pred_region
      %52 = dma.done [#allocation6], 512
    $region21: #{tpu_custom_call.1} parent=1 // pred_fallthru
      _
    // Predicated region
    $region22: #{tpu_custom_call.1} parent=1 // pred_check
      _
    $region23: #{tpu_custom_call.1} parent=1 // pred_check_branch
      %54 = sbr.rel (0) target = $region25
    $region24: #{tpu_custom_call.1} parent=1 // pred_region
      %55 = dma.done [#allocation6], 384
    $region25: #{tpu_custom_call.1} parent=1 // pred_fallthru
      _
    %v56 = vld [vmem:[#allocation2] sm:$0xff]
    %v57 = vld [vmem:[#allocation2 + $0x8] sm:$0xff]
    %v58 = vld [vmem:[#allocation2 + $0x10] sm:$0xff]
    %v59 = vld [vmem:[#allocation5] sm:$0xff]
    %v60 = vld [vmem:[#allocation5 + $0x8] sm:$0xff]
    %v61 = vld [vmem:[#allocation5 + $0x10] sm:$0xff]
    %v62 = vld [vmem:[#allocation5 + $0x18] sm:$0xff]
    %v63 = vld [vmem:[#allocation7] sm:$0xff]
    %v64 = vld [vmem:[#allocation7 + $0x8] sm:$0xff]
    %v65 = vld [vmem:[#allocation7 + $0x10] sm:$0xff]
    %vm66 = vcmp.ne.f32.partialorder %v56, %v56
    %vm67 = vcmp.ne.f32.partialorder %v57, %v57
    %vm68 = vcmp.ne.f32.partialorder %v58, %v58
    %v69 = vsel %vm66, 0.0, %v56
    %v70 = vsel %vm67, 0.0, %v57
    %v71 = vsel %vm68, 0.0, %v58
    %v72 = vsel %vm66, 0.0, %v63
    %v73 = vsel %vm67, 0.0, %v64
    %v74 = vsel %vm68, 0.0, %v65
    %v75 = vmax.f32 %v60, 0.0
    %vm76 = vcmp.ne.f32.partialorder %v60, %v60
    %v77 = vadd.f32 %v60, 0.0
    %v78 = vand.u32 2147483647, %v60
    %v79 = vsub.f32 0.0, %v78
    %v80 = vmul.f32 %v79, 1.442695
    %v81 = vpow.pop %v80
    %v82 = vadd.f32 %v81, 1.0
    %v83 = vlog2.pop %v82
    %v84 = vmul.f32 %v83, 0.6931472
    %v85 = vmul.f32 -0.5, %v81
    %v86 = vadd.f32 %v85, 1.0
    %v87 = vmul.f32 %v86, %v81
    %v88 = vand.u32 2147483647, %v81
    %vm89 = vcmp.lt.f32.partialorder %v88, 0.0004427343
    %v90 = vsel %vm89, %v87, %v84
    %v91 = vadd.f32 %v75, %v90
    %v92 = vsel %vm76, %v77, %v91
    %v93 = vmax.f32 %v92, 0.0001
    %v94 = vsub.f32 %v69, %v59
    %v95 = vrcp.pop %v93
    %v96 = vmul.f32 %v94, %v95
    %v97 = vmul.f32 %v96, %v96
    %v98 = vmul.f32 %v97, -0.5
    %v99 = vlog2.pop %v93
    %v100 = vmul.f32 %v99, 0.6931472
    %v101 = vsub.f32 %v98, %v100
    %v102 = vsub.f32 %v101, 0.9189385
    %v103 = vmul.f32 %v102, %v72
    %vm104 = vcmask 1041408
    %v105 = vsel %vm104, %v103, 0.0
    %v106 = vrot.slane %v105, 4
    %v107 = vadd.f32 %v105, %v106
    %v108 = vrot.slane %v107, 2
    %v109 = vadd.f32 %v107, %v108
    %v110 = vrot.slane %v109, 1
    %v111 = vadd.f32 %v109, %v110
    %v112 = vadd.f32 %v111, 0.0
    %v113 = vlaneseq
    %v114 = vshrl.u32 %v113, 7
    %vm115 = vcmp.lt.s32.totalorder %v114, 2
    %v116 = vsel %vm115, %v61, -1e+30
    %v117 = vrot.slane %v116, 4
    %v118 = vmax.f32 %v116, %v117
    %v119 = vrot.slane %v118, 2
    %v120 = vmax.f32 %v118, %v119
    %v121 = vrot.slane %v120, 1
    %v122 = vmax.f32 %v120, %v121
    %v123 = vsub.f32 %v116, %v122
    %v124 = vmul.f32 %v123, 1.442695
    %v125 = vpow.pop %v124
    %v126 = vrot.slane %v125, 4
    %v127 = vadd.f32 %v125, %v126
    %v128 = vrot.slane %v127, 2
    %v129 = vadd.f32 %v127, %v128
    %v130 = vrot.slane %v129, 1
    %v131 = vadd.f32 %v129, %v130
    %v132 = vrcp.pop %v131
    %v133 = vmul.f32 %v125, %v132
    %v134 = vmax.f32 %v133, 0.0001
    %v135 = vsel %vm115, %v134, 0.0
    %v136 = vrot.slane %v135, 4
    %v137 = vadd.f32 %v135, %v136
    %v138 = vrot.slane %v137, 2
    %v139 = vadd.f32 %v137, %v138
    %v140 = vrot.slane %v139, 1
    %v141 = vadd.f32 %v139, %v140
    %v142 = vcvt.f32.s32.to.zero.pseudo %v70
    %vm143 = vcmp.gt.s32.totalorder %v142, 0
    %v144 = vsel %vm143, %v142, 0
    %vm145 = vcmp.lt.s32.totalorder %v144, 1
    %v146 = vsel %vm145, %v144, 1
    %v147 = vlaneseq
    %v148 = vshrl.u32 %v147, 7
    %v149 = vsub.s32 0, %v148
    %v150 = vrot.slane %v146, %v149
    %vm151 = vcmp.eq.s32.totalorder %v114, %v150
    %v152 = vsel %vm151, %v135, 0.0
    %v153 = vrot.slane %v152, 4
    %v154 = vadd.f32 %v152, %v153
    %v155 = vrot.slane %v154, 2
    %v156 = vadd.f32 %v154, %v155
    %v157 = vrot.slane %v156, 1
    %v158 = vadd.f32 %v156, %v157
    %v159 = vlog2.pop %v158
    %v160 = vmul.f32 %v159, 0.6931472
    %v161 = vlog2.pop %v141
    %v162 = vmul.f32 %v161, 0.6931472
    %v163 = vsub.f32 %v160, %v162
    %v164 = vmul.f32 %v163, %v73
    %v165 = vadd.f32 %v164, 0.0
    %v166 = vadd.f32 %v112, %v165
    %vm167 = vcmp.lt.s32.totalorder %v114, 4
    %v168 = vsel %vm167, %v62, -1e+30
    %v169 = vrot.slane %v168, 4
    %v170 = vmax.f32 %v168, %v169
    %v171 = vrot.slane %v170, 2
    %v172 = vmax.f32 %v170, %v171
    %v173 = vrot.slane %v172, 1
    %v174 = vmax.f32 %v172, %v173
    %v175 = vsub.f32 %v168, %v174
    %v176 = vmul.f32 %v175, 1.442695
    %v177 = vpow.pop %v176
    %v178 = vrot.slane %v177, 4
    %v179 = vadd.f32 %v177, %v178
    %v180 = vrot.slane %v179, 2
    %v181 = vadd.f32 %v179, %v180
    %v182 = vrot.slane %v181, 1
    %v183 = vadd.f32 %v181, %v182
    %v184 = vrcp.pop %v183
    %v185 = vmul.f32 %v177, %v184
    %v186 = vmax.f32 %v185, 0.0001
    %v187 = vsel %vm167, %v186, 0.0
    %v188 = vrot.slane %v187, 4
    %v189 = vadd.f32 %v187, %v188
    %v190 = vrot.slane %v189, 2
    %v191 = vadd.f32 %v189, %v190
    %v192 = vrot.slane %v191, 1
    %v193 = vadd.f32 %v191, %v192
    %v194 = vcvt.f32.s32.to.zero.pseudo %v71
    %vm195 = vcmp.gt.s32.totalorder %v194, 0
    %v196 = vsel %vm195, %v194, 0
    %vm197 = vcmp.lt.s32.totalorder %v196, 3
    %v198 = vsel %vm197, %v196, 3
    %v199 = vlaneseq
    %v200 = vshrl.u32 %v199, 7
    %v201 = vsub.s32 0, %v200
    %v202 = vrot.slane %v198, %v201
    %vm203 = vcmp.eq.s32.totalorder %v114, %v202
    %v204 = vsel %vm203, %v187, 0.0
    %v205 = vrot.slane %v204, 4
    %v206 = vadd.f32 %v204, %v205
    %v207 = vrot.slane %v206, 2
    %v208 = vadd.f32 %v206, %v207
    %v209 = vrot.slane %v208, 1
    %v210 = vadd.f32 %v208, %v209
    %v211 = vlog2.pop %v210
    %v212 = vmul.f32 %v211, 0.6931472
    %v213 = vlog2.pop %v193
    %v214 = vmul.f32 %v213, 0.6931472
    %v215 = vsub.f32 %v212, %v214
    %v216 = vmul.f32 %v215, %v74
    %v217 = vadd.f32 %v216, 0.0
    %v218 = vadd.f32 %v166, %v217
    %219 = vst [vmem:[#allocation8] sm:$0x1] %v218
    // Predicated region
    $region26: #{tpu_custom_call.1} parent=1 // pred_check
      _
    $region27: #{tpu_custom_call.1} parent=1 // pred_check_branch
      %221 = sbr.rel (0) target = $region29
    $region28: #{tpu_custom_call.1} parent=1 // pred_region
      %s223 = ssub.s32 16, 16
      %224 = vsyncadd [#allocation4], %s223
      %s226 = sshll.u32 [#allocation8], 4
      %s227 = int_to_ptr.vmem [resolvable:$true] %s226
      %229 = dma.vmem_to_hbm [thread:$0]  %s227, 16, %s3, [#allocation4]
    $region29: #{tpu_custom_call.1} parent=1 // pred_fallthru
      _
    // Predicated region
    $region30: #{tpu_custom_call.1} parent=1 // pred_check
      _
    $region31: #{tpu_custom_call.1} parent=1 // pred_check_branch
      %231 = sbr.rel (0) target = $region33
    $region32: #{tpu_custom_call.1} parent=1 // pred_region
      %232 = dma.done [#allocation4], 16
    $region33: #{tpu_custom_call.1} parent=1 // pred_fallthru
      _
    %233 = vsyncpa [#allocation3], 1
    %234 = vsyncpa [#allocation6], 1
    %235 = vsyncpa [#allocation4], 1

</llo_original>
